<compile_context>
chip_gen: v7x
topology: tpu7x:2x2x1
jax: 0.10.0
libtpu: 0.0.40
codegen_flags: <defaults>
</compile_context>

<pallas_src>
import jax
import jax.numpy as jnp
from jax.experimental import pallas as pl
from jax.experimental.pallas import tpu as pltpu


def _round_up(x, m):
    return ((x + m - 1) // m) * m


def _mlp_kernel(x_ref, w1_ref, b1_ref, w2_ref, b2_ref, o_ref):
    # Layer 1 on the MXU: (TB, D)[bf16] @ (D, H)[bf16] -> f32 accumulate.
    h = jnp.dot(x_ref[...], w1_ref[...], preferred_element_type=jnp.float32)
    # Bias + ReLU in f32 on the VPU (valid on all generations incl. v5e).
    h = jnp.maximum(h + b1_ref[...], 0.0)                     # (TB, H) f32

    # Output layer (N=1): VPU multiply + XLU lane reduction; MXU stays free.
    logits = jnp.sum(h * w2_ref[...], axis=-1) + b2_ref[0]    # (TB,)

    # Lane-dense store: batch ends up on the lane axis of the (1, TB) tile.
    o_ref[...] = jax.nn.sigmoid(logits)[None, :]


def _choose_batch_tile(B, D, H, vmem_budget_bytes):
    """Pick batch tile TB from a VMEM working-set budget.

    Per-row bytes per grid step: 2*(D*2) double-buffered bf16 x tile,
    ~2*H*4 f32 hidden activations / temporaries, 2*4 double-buffered f32 out.
    Grid-invariant weights (double-buffered by the pipeliner) are charged once.
    """
    if B <= 1024:
        # Single tile: round only to the sublane/lane granule (cheap pad).
        return _round_up(B, 8) if B <= 128 else _round_up(B, 128)
    per_row = 4 * D + 8 * H + 8
    weight_bytes = 2 * (D * H * 2) + 4 * (H * 4)
    tb = max(128, ((vmem_budget_bytes - weight_bytes) // per_row) // 128 * 128)
    tb = min(tb, 16384)
    # Keep >= 2 grid blocks so the ("parallel",) axis can shard over v7x's 2 TCs.
    tb = min(tb, _round_up(pl.cdiv(B, 2), 128))
    return tb


def latent_mlp_classifier(x, w1, b1, w2, b2, *,
                          compute_dtype=jnp.bfloat16,
                          block_b=None,
                          vmem_budget_bytes=16 * 1024 * 1024):
    """Eval-mode forward of LatentMLPClassifier.

    x: (B, D) f32; w1: (D, H); b1: (1, H); w2: (H, 1); b2: (1, 1).
    Returns (B,) f32 probabilities. `block_b` (multiple of 128 if it does not
    cover B) overrides the automatic tile choice.
    """
    B, D = x.shape
    H = w1.shape[1]

    tb = block_b if block_b is not None else _choose_batch_tile(B, D, H, vmem_budget_bytes)
    n_blocks = pl.cdiv(B, tb)

    # Pad x only when a single tile must cover (and exceed) the whole batch
    # (at most ~1K rows -> negligible). For the multi-tile case the ragged
    # last tile is handled by the pipeliner (clamped reads; garbage rows are
    # sliced off below), avoiding a full extra HBM read+write of x.
    if n_blocks == 1 and tb != B:
        x = jnp.pad(x, ((0, tb - B), (0, 0)))

    x_c = x.astype(compute_dtype)
    w1_c = w1.astype(compute_dtype)
    b1_row = jnp.asarray(b1, jnp.float32).reshape(1, H)
    w2_row = jnp.asarray(w2, jnp.float32).reshape(1, H)   # (H, 1) column -> row
    b2_s = jnp.asarray(b2, jnp.float32).reshape(1)        # scalar, lives in SMEM

    out_cols = n_blocks * tb   # padded output allocation -> all stores full-width

    cost = pl.CostEstimate(
        flops=2 * B * D * H + 3 * B * H,
        bytes_accessed=(x_c.size * x_c.dtype.itemsize
                        + w1_c.size * w1_c.dtype.itemsize
                        + 4 * (2 * H + 1 + B)),
        transcendentals=B,
    )

    out = pl.pallas_call(
        _mlp_kernel,
        out_shape=jax.ShapeDtypeStruct((1, out_cols), jnp.float32),
        grid=(n_blocks,),
        in_specs=[
            pl.BlockSpec((tb, D), lambda i: (i, 0)),            # x: streamed batch tiles
            pl.BlockSpec((D, H), lambda i: (0, 0)),             # W1: grid-invariant
            pl.BlockSpec((1, H), lambda i: (0, 0)),             # b1: grid-invariant
            pl.BlockSpec((1, H), lambda i: (0, 0)),             # W2 row: grid-invariant
            pl.BlockSpec(memory_space=pltpu.MemorySpace.SMEM),  # b2 scalar
        ],
        out_specs=pl.BlockSpec((1, tb), lambda i: (0, i)),
        compiler_params=pltpu.CompilerParams(
            dimension_semantics=("parallel",),
            # Explicit scoped-VMEM budget: well under v7x's 64 MiB physical,
            # above v5e's 16 MiB default scoped limit.
            vmem_limit_bytes=32 * 1024 * 1024,
        ),
        cost_estimate=cost,
    )(x_c, w1_c, b1_row, w2_row, b2_s)

    # .squeeze(1) from the PyTorch module + drop batch padding (wrapper glue).
    return out[0, :B]


def init_params(key, input_dim, hidden_dim):
    """Deterministic init mimicking nn.Linear's U(-1/sqrt(fan_in), 1/sqrt(fan_in)).
    Weights are stored transposed vs PyTorch (W1: (D,H), W2: (H,1))."""
    k1, k2, k3, k4 = jax.random.split(key, 4)
    bound1 = 1.0 / jnp.sqrt(input_dim)
    bound2 = 1.0 / jnp.sqrt(hidden_dim)
    w1 = jax.random.uniform(k1, (input_dim, hidden_dim), jnp.float32, -bound1, bound1)
    b1 = jax.random.uniform(k2, (1, hidden_dim), jnp.float32, -bound1, bound1)
    w2 = jax.random.uniform(k3, (hidden_dim, 1), jnp.float32, -bound2, bound2)
    b2 = jax.random.uniform(k4, (1, 1), jnp.float32, -bound2, bound2)
    return w1, b1, w2, b2


def _reference(x, w1, b1, w2, b2, compute_dtype=jnp.float32):
    # Like-for-like reference: round layer-1 inputs to the kernel's MXU dtype
    # (bf16 products accumulate exactly in f32), rest in f32.
    xr = x.astype(compute_dtype).astype(jnp.float32)
    w1r = w1.astype(compute_dtype).astype(jnp.float32)
    h = jnp.maximum(xr @ w1r + b1.reshape(1, -1), 0.0)
    return jax.nn.sigmoid(h @ w2 + b2.reshape(1, 1))[:, 0]


if __name__ == "__main__":
    key = jax.random.PRNGKey(0)
    kx, kp = jax.random.split(key)

    # Small shapes consistent with the module (hidden_dim=128 default).
    B, INPUT_DIM, HIDDEN_DIM = 8, 32, 128
    x = jax.random.normal(kx, (B, INPUT_DIM), jnp.float32)
    w1, b1, w2, b2 = init_params(kp, INPUT_DIM, HIDDEN_DIM)

    y = jax.block_until_ready(latent_mlp_classifier(x, w1, b1, w2, b2))
    y_ref = _reference(x, w1, b1, w2, b2, compute_dtype=jnp.bfloat16)
    assert y.shape == (B,)
    assert jnp.allclose(y, y_ref, atol=1e-5, rtol=1e-4)

    # Multi-tile path with a ragged last tile (no wrapper-side pad of x).
    B2 = 300
    x2 = jax.random.normal(kx, (B2, INPUT_DIM), jnp.float32)
    y2 = jax.block_until_ready(
        latent_mlp_classifier(x2, w1, b1, w2, b2, block_b=128))
    y2_ref = _reference(x2, w1, b1, w2, b2, compute_dtype=jnp.bfloat16)
    assert y2.shape == (B2,)
    assert jnp.allclose(y2, y2_ref, atol=1e-5, rtol=1e-4)

    print("KERNEL_OK")
</pallas_src>

<mosaic_0001>
module attributes {stable_mosaic.version = 11 : i64} {
  func.func @_mlp_kernel(%arg0: i32, %arg1: memref<8x32xbf16, #tpu.memory_space<vmem>>, %arg2: memref<32x128xbf16, #tpu.memory_space<vmem>>, %arg3: memref<1x128xf32, #tpu.memory_space<vmem>>, %arg4: memref<1x128xf32, #tpu.memory_space<vmem>>, %arg5: memref<1xf32, #tpu.memory_space<smem>>, %arg6: memref<1x8xf32, #tpu.memory_space<vmem>>) attributes {dimension_semantics = [#tpu.dimension_semantics<parallel>], iteration_bounds = array<i64: 1>, scalar_prefetch = 0 : i64, scratch_operands = 0 : i64, tpu.core_type = #tpu.core_type<tc>, window_params = [{transform_indices = @transform_0, window_bounds = array<i64: 8, 32>}, {pipeline_mode = #tpu.pipeline_mode<synchronous>, transform_indices = @transform_1, window_bounds = array<i64: 32, 128>}, {pipeline_mode = #tpu.pipeline_mode<synchronous>, transform_indices = @transform_2, window_bounds = array<i64: 1, 128>}, {pipeline_mode = #tpu.pipeline_mode<synchronous>, transform_indices = @transform_3, window_bounds = array<i64: 1, 128>}, {transform_indices = @transform_4, window_bounds = array<i64: 1>}, {transform_indices = @transform_5, window_bounds = array<i64: 1, 8>}]} {
    %c0 = arith.constant 0 : index
    %c0_0 = arith.constant 0 : index
    %0 = vector.load %arg1[%c0, %c0_0] : memref<8x32xbf16, #tpu.memory_space<vmem>>, vector<8x32xbf16>
    %c0_1 = arith.constant 0 : index
    %c0_2 = arith.constant 0 : index
    %1 = vector.load %arg2[%c0_1, %c0_2] : memref<32x128xbf16, #tpu.memory_space<vmem>>, vector<32x128xbf16>
    %cst = arith.constant dense<0.000000e+00> : vector<8x128xf32>
    %2 = tpu.matmul %0, %1, %cst {dimension_numbers = #tpu.dot_dimension_numbers<[1], [0], [0], [1], [0, 0, 1, 1], [], []>} : vector<8x32xbf16>, vector<32x128xbf16>, vector<8x128xf32> -> vector<8x128xf32>
    %c0_3 = arith.constant 0 : index
    %c0_4 = arith.constant 0 : index
    %3 = vector.load %arg3[%c0_3, %c0_4] : memref<1x128xf32, #tpu.memory_space<vmem>>, vector<1x128xf32>
    %4 = vector.broadcast %3 : vector<1x128xf32> to vector<8x128xf32>
    %5 = arith.addf %2, %4 : vector<8x128xf32>
    %cst_5 = arith.constant 0.000000e+00 : f32
    %6 = vector.broadcast %cst_5 : f32 to vector<8x128xf32>
    %7 = arith.maximumf %5, %6 : vector<8x128xf32>
    %c0_6 = arith.constant 0 : index
    %c0_7 = arith.constant 0 : index
    %8 = vector.load %arg4[%c0_6, %c0_7] : memref<1x128xf32, #tpu.memory_space<vmem>>, vector<1x128xf32>
    %9 = vector.broadcast %8 : vector<1x128xf32> to vector<8x128xf32>
    %10 = arith.mulf %7, %9 : vector<8x128xf32>
    %cst_8 = arith.constant dense<0.000000e+00> : vector<8xf32>
    %11 = vector.multi_reduction <add>, %10, %cst_8 [1] : vector<8x128xf32> to vector<8xf32>
    %c0_9 = arith.constant 0 : index
    %12 = memref.load %arg5[%c0_9] : memref<1xf32, #tpu.memory_space<smem>>
    %13 = vector.broadcast %12 : f32 to vector<8xf32>
    %14 = arith.addf %11, %13 : vector<8xf32>
    %15 = arith.negf %14 : vector<8xf32>
    %16 = math.exp %15 : vector<8xf32>
    %cst_10 = arith.constant 1.000000e+00 : f32
    %17 = vector.broadcast %cst_10 : f32 to vector<8xf32>
    %18 = arith.addf %17, %16 : vector<8xf32>
    %19 = arith.divf %17, %18 : vector<8xf32>
    %20 = vector.shape_cast %19 : vector<8xf32> to vector<1x8xf32>
    %c0_11 = arith.constant 0 : index
    %c0_12 = arith.constant 0 : index
    %21 = vector.load %arg6[%c0_11, %c0_12] : memref<1x8xf32, #tpu.memory_space<vmem>>, vector<1x8xf32>
    tpu.vector_store %arg6[%c0_11, %c0_12], %20 {strides = array<i32>} : memref<1x8xf32, #tpu.memory_space<vmem>>, vector<1x8xf32>,
    return
  }
  func.func @transform_0(%arg0: i32) -> (i32, i32) {
    %c0_i32 = arith.constant 0 : i32
    %c0_i32_0 = arith.constant 0 : i32
    return %arg0, %c0_i32 : i32, i32
  }
  func.func @transform_1(%arg0: i32) -> (i32, i32) {
    %c0_i32 = arith.constant 0 : i32
    %c0_i32_0 = arith.constant 0 : i32
    %c0_i32_1 = arith.constant 0 : i32
    return %c0_i32, %c0_i32_0 : i32, i32
  }
  func.func @transform_2(%arg0: i32) -> (i32, i32) {
    %c0_i32 = arith.constant 0 : i32
    %c0_i32_0 = arith.constant 0 : i32
    %c0_i32_1 = arith.constant 0 : i32
    return %c0_i32, %c0_i32_0 : i32, i32
  }
  func.func @transform_3(%arg0: i32) -> (i32, i32) {
    %c0_i32 = arith.constant 0 : i32
    %c0_i32_0 = arith.constant 0 : i32
    %c0_i32_1 = arith.constant 0 : i32
    return %c0_i32, %c0_i32_0 : i32, i32
  }
  func.func @transform_4(%arg0: i32) -> i32 {
    %c0_i32 = arith.constant 0 : i32
    %c0_i32_0 = arith.constant 0 : i32
    return %c0_i32 : i32
  }
  func.func @transform_5(%arg0: i32) -> (i32, i32) {
    %c0_i32 = arith.constant 0 : i32
    %c0_i32_0 = arith.constant 0 : i32
    return %c0_i32, %arg0 : i32, i32
  }
}

</mosaic_0001>

<llo_original>
// kernel: tpu_custom_call.1
$region0: #{tpu_custom_call.1}
  #allocation0 [shape = 'u32[]', space=smem, size = 0x4, offset = 0x4, fixed_abs, tag = 'smem constant byte address 0x4 - core index']
  #allocation1 [shape = 'u32[144,128]{1,0:T(1,128)}', space=vmem, size = 0x12000, scoped, tag = 'internal scratch']
  #allocation2 [shape = 'f32[1]{0:T(128)S(6)}', space=smem, size = 0x200, scoped, tag = 'scoped memory for tpu_custom_call.1']
  %s0 = inlined_call_operand.hbm [shape: bf16[8,32], index: 0, kind: input, shape index: {}]
  %s1 = inlined_call_operand.hbm [shape: bf16[32,128], index: 1, kind: input, shape index: {}]
  %s2 = inlined_call_operand.vmem [shape: f32[1,128], index: 2, kind: input, shape index: {}]
  %s3 = inlined_call_operand.vmem [shape: f32[1,128], index: 3, kind: input, shape index: {}]
  %s4 = inlined_call_operand.<no memory space> [shape: f32[1], index: 4, kind: input, shape index: {}]
  %s5 = inlined_call_operand.hbm [shape: f32[1,8], index: 5, kind: output, shape index: {}]
  %s6 = sld [smem:[#allocation0]]
  $region38: #{tpu_custom_call.1} parent=0
    _
  %s8 = ssub.s32 1, %s6
  %s9 = scalar_select 0, %s8, %s6
  %10 = sst [smem:[#allocation2]] %s4
  $region1: #{tpu_custom_call.1} parent=0
    #allocation3 [shape = 'u8[2048]{0}', space=vmem, size = 0x800, scoped, tag = 'input window, operand 0, single buffered']
    #allocation4 [shape = 's32[1]{0}', space=sflag, size = 0x4, scoped, tag = 'scoped memory for tpu_custom_call.1']
    #allocation5 [shape = 's32[1]{0}', space=sflag, size = 0x4, scoped, tag = 'scoped memory for tpu_custom_call.1']
    #allocation6 [shape = 'u8[8192]{0}', space=vmem, size = 0x2000, scoped, tag = 'input window, operand 1, single buffered']
    #allocation7 [shape = 's32[1]{0}', space=sflag, size = 0x4, scoped, tag = 'scoped memory for tpu_custom_call.1']
    #allocation8 [shape = 'u8[512]{0}', space=vmem, size = 0x400, scoped, tag = 'output window, operand 0, single buffered']
    %11 = vsyncpa [#allocation4], 0
    %12 = vsyncpa [#allocation7], 0
    %13 = vsyncpa [#allocation5], 0
    // Predicated region
    $region2: #{tpu_custom_call.1} parent=1 // pred_check
      _
    $region3: #{tpu_custom_call.1} parent=1 // pred_check_branch
      %15 = sbr.rel (0) target = $region5
    $region4: #{tpu_custom_call.1} parent=1 // pred_region
      %s17 = ssub.s32 64, 64
      %18 = vsyncadd [#allocation4], %s17
      %s20 = sshll.u32 [#allocation3], 4
      %s21 = int_to_ptr.vmem [resolvable:$true] %s20
      %23 = dma.hbm_to_vmem [thread:$0]  %s0, 64, %s21, [#allocation4]
    $region5: #{tpu_custom_call.1} parent=1 // pred_fallthru
      _
    // Predicated region
    $region6: #{tpu_custom_call.1} parent=1 // pred_check
      _
    $region7: #{tpu_custom_call.1} parent=1 // pred_check_branch
      %25 = sbr.rel (0) target = $region9
    $region8: #{tpu_custom_call.1} parent=1 // pred_region
      %s27 = ssub.s32 256, 256
      %28 = vsyncadd [#allocation7], %s27
      %s29 = sshll.u32 [#allocation6], 4
      %s30 = int_to_ptr.vmem [resolvable:$true] %s29
      %35 = dma.hbm_to_vmem [thread:$0]  %s1, 256, %s30, [#allocation7], 64, 64, 4
    $region9: #{tpu_custom_call.1} parent=1 // pred_fallthru
      _
    // Predicated region
    $region10: #{tpu_custom_call.1} parent=1 // pred_check
      _
    $region11: #{tpu_custom_call.1} parent=1 // pred_check_branch
      %37 = sbr.rel (0) target = $region13
    $region12: #{tpu_custom_call.1} parent=1 // pred_region
      _
    $region13: #{tpu_custom_call.1} parent=1 // pred_fallthru
      _
    // Predicated region
    $region14: #{tpu_custom_call.1} parent=1 // pred_check
      _
    $region15: #{tpu_custom_call.1} parent=1 // pred_check_branch
      %39 = sbr.rel (0) target = $region17
    $region16: #{tpu_custom_call.1} parent=1 // pred_region
      _
    $region17: #{tpu_custom_call.1} parent=1 // pred_fallthru
      _
    // Predicated region
    $region18: #{tpu_custom_call.1} parent=1 // pred_check
      _
    $region19: #{tpu_custom_call.1} parent=1 // pred_check_branch
      %41 = sbr.rel (0) target = $region21
    $region20: #{tpu_custom_call.1} parent=1 // pred_region
      _
    $region21: #{tpu_custom_call.1} parent=1 // pred_fallthru
      _
    // Predicated region
    $region22: #{tpu_custom_call.1} parent=1 // pred_check
      _
    $region23: #{tpu_custom_call.1} parent=1 // pred_check_branch
      %43 = sbr.rel (0) target = $region25
    $region24: #{tpu_custom_call.1} parent=1 // pred_region
      %44 = dma.done [#allocation4], 64
    $region25: #{tpu_custom_call.1} parent=1 // pred_fallthru
      _
    // Predicated region
    $region26: #{tpu_custom_call.1} parent=1 // pred_check
      _
    $region27: #{tpu_custom_call.1} parent=1 // pred_check_branch
      %46 = sbr.rel (0) target = $region29
    $region28: #{tpu_custom_call.1} parent=1 // pred_region
      %47 = dma.done [#allocation7], 256
    $region29: #{tpu_custom_call.1} parent=1 // pred_fallthru
      _
    %v49 = vld [vmem:[#allocation3] sm:$0xf]
    %v50 = vld [vmem:[#allocation6] sm:$0xf]
    %v51 = vld [vmem:[#allocation6 + $0x4] sm:$0xf]
    %v52 = vld [vmem:[#allocation6 + $0x8] sm:$0xf]
    %v53 = vld [vmem:[#allocation6 + $0xc] sm:$0xf]
    %v54 = vld [vmem:[%s2] sm:$0x1]
    %v56 = vlaneseq
    %v57 = vshrl.u32 %v56, 7
    %v58 = vsub.s32 0, %v57
    %v59 = vrot.slane %v54, %v58
    %v65 = vunpack.c.l.b16 %v50
    %v66 = vunpack.c.l.b16 %v51
    %v67 = vunpack.c.l.b16 %v52
    %v68 = vunpack.c.l.b16 %v53
    %v69 = vpack.c.b16 %v66, %v65
    %v70 = vpack.c.b16 %v68, %v67
    %vm73 = vcmask 261120
    %v75 = vsel %vm73, %v49, 0
    %77 = vmatprep.subr.bf16.mxu0 0
    %78 = vmatpush1.bf16.msra.mxu0 %v69
    %79 = vmatprep.subr.bf16.mxu0 0
    %80 = vmatpush1.bf16.msra.mxu0 %v70
    %81 = vmatprep.subr.bf16.mxu0 0
    %82 = vmatpush1.bf16.msra.mxu0 0
    %83 = vmatprep.subr.bf16.mxu0 0
    %84 = vmatpush1.bf16.msra.mxu0 0
    %85 = vmatprep.subr.bf16.mxu0 0
    %86 = vmatpush1.bf16.msra.mxu0 0
    %87 = vmatprep.subr.bf16.mxu0 0
    %88 = vmatpush1.bf16.msra.mxu0 0
    %89 = vmatprep.subr.bf16.mxu0 0
    %90 = vmatpush1.bf16.msra.mxu0 0
    %91 = vmatprep.subr.bf16.mxu0 0
    %92 = vmatpush1.bf16.msra.mxu0 0
    %93 = vmatprep.subr.bf16.mxu0 0
    %94 = vmatpush1.bf16.msra.mxu0 0
    %95 = vmatprep.subr.bf16.mxu0 0
    %96 = vmatpush1.bf16.msra.mxu0 0
    %97 = vmatprep.subr.bf16.mxu0 0
    %98 = vmatpush1.bf16.msra.mxu0 0
    %99 = vmatprep.subr.bf16.mxu0 0
    %100 = vmatpush1.bf16.msra.mxu0 0
    %101 = vmatprep.subr.bf16.mxu0 0
    %102 = vmatpush1.bf16.msra.mxu0 0
    %103 = vmatprep.subr.bf16.mxu0 0
    %104 = vmatpush1.bf16.msra.mxu0 0
    %105 = vmatprep.subr.bf16.mxu0 0
    %106 = vmatpush1.bf16.msra.mxu0 0
    %107 = vmatprep.subr.bf16.mxu0 0
    %108 = vmatpush1.bf16.msra.mxu0 0
    %109 = vmatprep.mubr.bf16.mxu0 0
    %110 = vmatmul.mubr.bf16.gmra.mrb[0].mxu0 %v75
    %v111 = vpop.f32.mrb[0].mxu0
    %v112 = vadd.f32 %v59, %v111
    %v113 = vpop.f32.mrb[0].mxu0
    %v114 = vpop.f32.mrb[0].mxu0
    %v115 = vpop.f32.mrb[0].mxu0
    %116 = vdwg.mxu0
    %v117 = vmax.f32 %v112, 0.0
    %v118 = vld [vmem:[%s3] sm:$0x1]
    %v120 = vlaneseq
    %v121 = vshrl.u32 %v120, 7
    %v122 = vsub.s32 0, %v121
    %v123 = vrot.slane %v118, %v122
    %v125 = vmul.f32 %v117, %v123
    %126 = vadd.xlane.f32.xlu0 %v125
    %v127 = vpop.xlane.xlu0 %126
    %s128 = sld [smem:[#allocation2]]
    %v129 = vstv %s128
    %v130 = vadd.f32 %v127, %v129
    %v131 = vxor.u32 %v130, 2147483648
    %v132 = vmul.f32 %v131, 1.442695
    %v133 = vpow.pop %v132
    %v134 = vadd.f32 %v133, 1.0
    %v135 = vrcp.pop %v134
    %v136 = vmul.f32 1.0, %v135
    %v138 = vlaneseq
    %v139 = vand.u32 %v138, 127
    %v140 = vlaneseq
    %v141 = vshrl.u32 %v140, 7
    %v142 = vsub.s32 %v139, %v141
    %v143 = vrot.slane %v136, %v142
    %vm145 = vcmask 57344
    %146 = vst.msk [vmem:[#allocation8] sm:$0x1] %vm145, %v143
    // Predicated region
    $region30: #{tpu_custom_call.1} parent=1 // pred_check
      _
    $region31: #{tpu_custom_call.1} parent=1 // pred_check_branch
      %148 = sbr.rel (0) target = $region33
    $region32: #{tpu_custom_call.1} parent=1 // pred_region
      %s150 = ssub.s32 16, 16
      %151 = vsyncadd [#allocation5], %s150
      %s153 = sshll.u32 [#allocation8], 4
      %s154 = int_to_ptr.vmem [resolvable:$true] %s153
      %156 = dma.vmem_to_hbm [thread:$0]  %s154, 16, %s5, [#allocation5]
    $region33: #{tpu_custom_call.1} parent=1 // pred_fallthru
      _
    // Predicated region
    $region34: #{tpu_custom_call.1} parent=1 // pred_check
      _
    $region35: #{tpu_custom_call.1} parent=1 // pred_check_branch
      %158 = sbr.rel (0) target = $region37
    $region36: #{tpu_custom_call.1} parent=1 // pred_region
      %159 = dma.done [#allocation5], 16
    $region37: #{tpu_custom_call.1} parent=1 // pred_fallthru
      _
    %160 = vsyncpa [#allocation4], 1
    %161 = vsyncpa [#allocation7], 1
    %162 = vsyncpa [#allocation5], 1

</llo_original>
